<compile_context>
chip_gen: v7x
topology: tpu7x:2x2x1
jax: 0.10.0
libtpu: 0.0.40
codegen_flags: <defaults>
</compile_context>

<pallas_src>
import jax
import jax.numpy as jnp
from jax import lax
from jax.experimental import pallas as pl
from jax.experimental.pallas import tpu as pltpu


def _round_up(a, m):
    return ((a + m - 1) // m) * m


def _scaled_spectral_kernel(scale_ref, x_ref, w_ref, kb_ref, o_ref):
    """Hot path: spectral-scaled Linear, all scaling applied post-matmul.

    scale_ref : SMEM f32[1]        -> [k / sigma]
    x_ref     : VMEM [TM, Dp]      (input row tile)
    w_ref     : VMEM [Dp, Dp]      (nn.Linear.weight layout: (out, in); resident)
    kb_ref    : VMEM [1, Dp]       (k * bias; resident)
    o_ref     : VMEM [TM, Dp]
    """
    # y = x @ W^T: contracting dims (1, 1) lets the MXU consume the (out, in)
    # weight layout directly -- no XLU transpose, no D*D temporary.
    y = lax.dot_general(
        x_ref[...], w_ref[...],
        dimension_numbers=(((1,), (1,)), ((), ())),
        preferred_element_type=jnp.float32)
    # Single fused multiply-add epilogue on the f32 accumulator:
    #   (k / sigma) * y + k * b
    o_ref[...] = (y * scale_ref[0] + kb_ref[...]).astype(o_ref.dtype)


def scaled_spectral_forward(x, w, b, k, u, *, n_power_iterations=1, eps=1e-12,
                            block_rows=256, matmul_dtype=None):
    """JAX wrapper reproducing scaled_spectral.forward.

    The spectral_norm power iteration (tiny D-length matvecs over the D x D
    weight) is parameter-setup glue and stays in plain JAX, matching
    torch.nn.utils.spectral_norm; the matmul / bias / scaling hot path runs
    in the Pallas kernel.

    matmul_dtype: optionally jnp.bfloat16 to feed bf16 operands to the MXU
    (v6e/v7x fast path, halves weight VMEM/HBM footprint). Default None keeps
    f32 operands for exact parity with the PyTorch module.
    """
    orig_dtype = x.dtype
    N, D = x.shape
    w = w.astype(jnp.float32)
    b = b.astype(jnp.float32)

    # --- spectral_norm power iteration (plain JAX; matches torch semantics) --
    def _normalize(v):
        # torch.nn.functional.normalize uses max(norm, eps)
        return v / jnp.maximum(jnp.linalg.norm(v), eps)

    u = _normalize(u.astype(jnp.float32))
    v = None
    for _ in range(max(1, n_power_iterations)):
        v = _normalize(w.T @ u)
        u = _normalize(w @ v)
    sigma = u @ (w @ v)

    k = jnp.asarray(k, jnp.float32).reshape(())
    scale = (k / sigma).astype(jnp.float32).reshape(1)   # folded post-matmul scalar
    kb = (k * b).reshape(1, D)                           # k-scaled bias

    # --- pad to lane/sublane friendly shapes ---------------------------------
    d_pad = _round_up(D, 128)                 # lane-dense stores
    tm = min(block_rows, _round_up(N, 8))     # row tile (multiple of 8 sublanes)
    n_pad = _round_up(N, tm)

    x_p = jnp.zeros((n_pad, d_pad), jnp.float32).at[:N, :D].set(
        x.astype(jnp.float32))
    w_p = jnp.zeros((d_pad, d_pad), jnp.float32).at[:D, :D].set(w)
    kb_p = jnp.zeros((1, d_pad), jnp.float32).at[:, :D].set(kb)

    if matmul_dtype is not None:
        x_p = x_p.astype(matmul_dtype)
        w_p = w_p.astype(matmul_dtype)

    grid = (n_pad // tm,)

    in_itemsize = jnp.dtype(x_p.dtype).itemsize
    w_itemsize = jnp.dtype(w_p.dtype).itemsize
    out_itemsize = jnp.dtype(orig_dtype).itemsize

    # resident W + bias, plus double-buffered x and out tiles, plus headroom;
    # capped at 64 MiB so the limit is also valid on v7x.
    resident_bytes = d_pad * d_pad * w_itemsize + d_pad * 4
    pipelined_bytes = 2 * tm * d_pad * in_itemsize + 2 * tm * d_pad * out_itemsize
    vmem_limit = int(min(max(resident_bytes + pipelined_bytes + (4 << 20),
                             16 << 20), 64 << 20))

    cost = pl.CostEstimate(
        flops=2 * n_pad * d_pad * d_pad,
        transcendentals=0,
        bytes_accessed=int(n_pad * d_pad * in_itemsize
                           + d_pad * d_pad * w_itemsize
                           + n_pad * d_pad * out_itemsize))

    out = pl.pallas_call(
        _scaled_spectral_kernel,
        out_shape=jax.ShapeDtypeStruct((n_pad, d_pad), orig_dtype),
        grid=grid,
        in_specs=[
            pl.BlockSpec(memory_space=pltpu.MemorySpace.SMEM),    # [k/sigma]
            pl.BlockSpec((tm, d_pad), lambda i: (i, 0)),          # x row tile
            pl.BlockSpec((d_pad, d_pad), lambda i: (0, 0)),       # W (resident)
            pl.BlockSpec((1, d_pad), lambda i: (0, 0)),           # k*b (resident)
        ],
        out_specs=pl.BlockSpec((tm, d_pad), lambda i: (i, 0)),
        compiler_params=pltpu.CompilerParams(
            dimension_semantics=("parallel",),
            vmem_limit_bytes=vmem_limit),
        cost_estimate=cost,
    )(scale, x_p, w_p, kb_p)

    return out[:N, :D]


if __name__ == "__main__":
    key = jax.random.PRNGKey(0)
    kx, ku = jax.random.split(key)

    batch, hidd_dims = 8, 32
    x = jax.random.normal(kx, (batch, hidd_dims), dtype=jnp.float32)
    # spectral_norm's power-iteration vector u (random in PyTorch; seeded here)
    u0 = jax.random.normal(ku, (hidd_dims,), dtype=jnp.float32)

    def reference(x, w, b, k, u0, eps=1e-12):
        def _normalize(v):
            return v / jnp.maximum(jnp.linalg.norm(v), eps)
        u = _normalize(u0)
        v = _normalize(w.T @ u)
        u = _normalize(w @ v)
        sigma = u @ (w @ v)
        return k * (x @ (w / sigma).T + b)

    # Case 1: module's actual init: nn.init.eye_(W), zero bias, k = 1.0.
    w1 = jnp.eye(hidd_dims, dtype=jnp.float32)
    b1 = jnp.zeros((hidd_dims,), dtype=jnp.float32)
    out1 = jax.block_until_ready(scaled_spectral_forward(x, w1, b1, 1.0, u0))
    ref1 = reference(x, w1, b1, 1.0, u0)
    assert out1.shape == (batch, hidd_dims)
    assert jnp.allclose(out1, ref1, atol=1e-5, rtol=1e-5)

    # Case 2: non-trivial sigma (W = 2I -> sigma = 2), nonzero bias, k != 1.
    w2 = 2.0 * jnp.eye(hidd_dims, dtype=jnp.float32)
    b2 = jnp.full((hidd_dims,), 0.3, dtype=jnp.float32)
    out2 = jax.block_until_ready(scaled_spectral_forward(x, w2, b2, 0.7, u0))
    ref2 = reference(x, w2, b2, 0.7, u0)
    assert out2.shape == (batch, hidd_dims)
    assert jnp.allclose(out2, ref2, atol=1e-5, rtol=1e-5)

    print("KERNEL_OK")
</pallas_src>

<mosaic_0001>
module attributes {stable_mosaic.version = 11 : i64} {
  func.func @_scaled_spectral_kernel(%arg0: i32, %arg1: memref<1xf32, #tpu.memory_space<smem>>, %arg2: memref<8x128xf32, #tpu.memory_space<vmem>>, %arg3: memref<128x128xf32, #tpu.memory_space<vmem>>, %arg4: memref<1x128xf32, #tpu.memory_space<vmem>>, %arg5: memref<8x128xf32, #tpu.memory_space<vmem>>) attributes {dimension_semantics = [#tpu.dimension_semantics<parallel>], iteration_bounds = array<i64: 1>, scalar_prefetch = 0 : i64, scratch_operands = 0 : i64, tpu.core_type = #tpu.core_type<tc>, window_params = [{transform_indices = @transform_0, window_bounds = array<i64: 1>}, {transform_indices = @transform_1, window_bounds = array<i64: 8, 128>}, {pipeline_mode = #tpu.pipeline_mode<synchronous>, transform_indices = @transform_2, window_bounds = array<i64: 128, 128>}, {pipeline_mode = #tpu.pipeline_mode<synchronous>, transform_indices = @transform_3, window_bounds = array<i64: 1, 128>}, {transform_indices = @transform_4, window_bounds = array<i64: 8, 128>}]} {
    %c0 = arith.constant 0 : index
    %c0_0 = arith.constant 0 : index
    %0 = vector.load %arg2[%c0, %c0_0] : memref<8x128xf32, #tpu.memory_space<vmem>>, vector<8x128xf32>
    %c0_1 = arith.constant 0 : index
    %c0_2 = arith.constant 0 : index
    %1 = vector.load %arg3[%c0_1, %c0_2] : memref<128x128xf32, #tpu.memory_space<vmem>>, vector<128x128xf32>
    %cst = arith.constant dense<0.000000e+00> : vector<8x128xf32>
    %2 = tpu.matmul %0, %1, %cst {dimension_numbers = #tpu.dot_dimension_numbers<[1], [1], [0], [0], [0, 0, 1, 0], [], []>} : vector<8x128xf32>, vector<128x128xf32>, vector<8x128xf32> -> vector<8x128xf32>
    %c0_3 = arith.constant 0 : index
    %3 = memref.load %arg1[%c0_3] : memref<1xf32, #tpu.memory_space<smem>>
    %4 = vector.broadcast %3 : f32 to vector<8x128xf32>
    %5 = arith.mulf %2, %4 : vector<8x128xf32>
    %c0_4 = arith.constant 0 : index
    %c0_5 = arith.constant 0 : index
    %6 = vector.load %arg4[%c0_4, %c0_5] : memref<1x128xf32, #tpu.memory_space<vmem>>, vector<1x128xf32>
    %7 = vector.broadcast %6 : vector<1x128xf32> to vector<8x128xf32>
    %8 = arith.addf %5, %7 : vector<8x128xf32>
    %c0_6 = arith.constant 0 : index
    %c0_7 = arith.constant 0 : index
    %9 = vector.load %arg5[%c0_6, %c0_7] : memref<8x128xf32, #tpu.memory_space<vmem>>, vector<8x128xf32>
    tpu.vector_store %arg5[%c0_6, %c0_7], %8 {strides = array<i32>} : memref<8x128xf32, #tpu.memory_space<vmem>>, vector<8x128xf32>,
    return
  }
  func.func @transform_0(%arg0: i32) -> i32 {
    %c0_i32 = arith.constant 0 : i32
    %c0_i32_0 = arith.constant 0 : i32
    return %c0_i32 : i32
  }
  func.func @transform_1(%arg0: i32) -> (i32, i32) {
    %c0_i32 = arith.constant 0 : i32
    %c0_i32_0 = arith.constant 0 : i32
    return %arg0, %c0_i32 : i32, i32
  }
  func.func @transform_2(%arg0: i32) -> (i32, i32) {
    %c0_i32 = arith.constant 0 : i32
    %c0_i32_0 = arith.constant 0 : i32
    %c0_i32_1 = arith.constant 0 : i32
    return %c0_i32, %c0_i32_0 : i32, i32
  }
  func.func @transform_3(%arg0: i32) -> (i32, i32) {
    %c0_i32 = arith.constant 0 : i32
    %c0_i32_0 = arith.constant 0 : i32
    %c0_i32_1 = arith.constant 0 : i32
    return %c0_i32, %c0_i32_0 : i32, i32
  }
  func.func @transform_4(%arg0: i32) -> (i32, i32) {
    %c0_i32 = arith.constant 0 : i32
    %c0_i32_0 = arith.constant 0 : i32
    return %arg0, %c0_i32 : i32, i32
  }
}

</mosaic_0001>

<llo_original>
// kernel: tpu_custom_call.1
$region0: #{tpu_custom_call.1}
  #allocation0 [shape = 'u32[]', space=smem, size = 0x4, offset = 0x4, fixed_abs, tag = 'smem constant byte address 0x4 - core index']
  #allocation1 [shape = 'u32[144,128]{1,0:T(1,128)}', space=vmem, size = 0x12000, scoped, tag = 'internal scratch']
  #allocation2 [shape = 'f32[1]{0:T(128)S(6)}', space=smem, size = 0x200, scoped, tag = 'scoped memory for tpu_custom_call.1']
  %s0 = inlined_call_operand.<no memory space> [shape: f32[1], index: 0, kind: input, shape index: {}]
  %s1 = inlined_call_operand.hbm [shape: f32[8,128], index: 1, kind: input, shape index: {}]
  %s2 = inlined_call_operand.hbm [shape: f32[128,128], index: 2, kind: input, shape index: {}]
  %s3 = inlined_call_operand.vmem [shape: f32[1,128], index: 3, kind: input, shape index: {}]
  %s4 = inlined_call_operand.hbm [shape: f32[8,128], index: 4, kind: output, shape index: {}]
  %s5 = sld [smem:[#allocation0]]
  $region34: #{tpu_custom_call.1} parent=0
    _
  %s7 = ssub.s32 1, %s5
  %s8 = scalar_select 0, %s7, %s5
  %9 = sst [smem:[#allocation2]] %s0
  $region1: #{tpu_custom_call.1} parent=0
    #allocation3 [shape = 'u8[4096]{0}', space=vmem, size = 0x1000, scoped, tag = 'input window, operand 1, single buffered']
    #allocation4 [shape = 's32[1]{0}', space=sflag, size = 0x4, scoped, tag = 'scoped memory for tpu_custom_call.1']
    #allocation5 [shape = 's32[1]{0}', space=sflag, size = 0x4, scoped, tag = 'scoped memory for tpu_custom_call.1']
    #allocation6 [shape = 'u8[65536]{0}', space=vmem, size = 0x10000, scoped, tag = 'input window, operand 2, single buffered']
    #allocation7 [shape = 's32[1]{0}', space=sflag, size = 0x4, scoped, tag = 'scoped memory for tpu_custom_call.1']
    #allocation8 [shape = 'u8[4096]{0}', space=vmem, size = 0x1000, scoped, tag = 'output window, operand 0, single buffered']
    %10 = vsyncpa [#allocation4], 0
    %11 = vsyncpa [#allocation7], 0
    %12 = vsyncpa [#allocation5], 0
    // Predicated region
    $region2: #{tpu_custom_call.1} parent=1 // pred_check
      _
    $region3: #{tpu_custom_call.1} parent=1 // pred_check_branch
      %14 = sbr.rel (0) target = $region5
    $region4: #{tpu_custom_call.1} parent=1 // pred_region
      _
    $region5: #{tpu_custom_call.1} parent=1 // pred_fallthru
      _
    // Predicated region
    $region6: #{tpu_custom_call.1} parent=1 // pred_check
      _
    $region7: #{tpu_custom_call.1} parent=1 // pred_check_branch
      %16 = sbr.rel (0) target = $region9
    $region8: #{tpu_custom_call.1} parent=1 // pred_region
      %s18 = ssub.s32 128, 128
      %19 = vsyncadd [#allocation4], %s18
      %s21 = sshll.u32 [#allocation3], 4
      %s22 = int_to_ptr.vmem [resolvable:$true] %s21
      %24 = dma.hbm_to_vmem [thread:$0]  %s1, 128, %s22, [#allocation4]
    $region9: #{tpu_custom_call.1} parent=1 // pred_fallthru
      _
    // Predicated region
    $region10: #{tpu_custom_call.1} parent=1 // pred_check
      _
    $region11: #{tpu_custom_call.1} parent=1 // pred_check_branch
      %26 = sbr.rel (0) target = $region13
    $region12: #{tpu_custom_call.1} parent=1 // pred_region
      %s28 = ssub.s32 2048, 2048
      %29 = vsyncadd [#allocation7], %s28
      %s30 = sshll.u32 [#allocation6], 4
      %s31 = int_to_ptr.vmem [resolvable:$true] %s30
      %36 = dma.hbm_to_vmem [thread:$0]  %s2, 2048, %s31, [#allocation7], 128, 128, 8
    $region13: #{tpu_custom_call.1} parent=1 // pred_fallthru
      _
    // Predicated region
    $region14: #{tpu_custom_call.1} parent=1 // pred_check
      _
    $region15: #{tpu_custom_call.1} parent=1 // pred_check_branch
      %38 = sbr.rel (0) target = $region17
    $region16: #{tpu_custom_call.1} parent=1 // pred_region
      _
    $region17: #{tpu_custom_call.1} parent=1 // pred_fallthru
      _
    // Predicated region
    $region18: #{tpu_custom_call.1} parent=1 // pred_check
      _
    $region19: #{tpu_custom_call.1} parent=1 // pred_check_branch
      %40 = sbr.rel (0) target = $region21
    $region20: #{tpu_custom_call.1} parent=1 // pred_region
      %41 = dma.done [#allocation4], 128
    $region21: #{tpu_custom_call.1} parent=1 // pred_fallthru
      _
    // Predicated region
    $region22: #{tpu_custom_call.1} parent=1 // pred_check
      _
    $region23: #{tpu_custom_call.1} parent=1 // pred_check_branch
      %43 = sbr.rel (0) target = $region25
    $region24: #{tpu_custom_call.1} parent=1 // pred_region
      %44 = dma.done [#allocation7], 2048
    $region25: #{tpu_custom_call.1} parent=1 // pred_fallthru
      _
    %v45 = vld [vmem:[#allocation3] sm:$0xff]
    %v46 = vld [vmem:[#allocation6] sm:$0xff]
    %v47 = vld [vmem:[#allocation6 + $0x8] sm:$0xff]
    %v48 = vld [vmem:[#allocation6 + $0x10] sm:$0xff]
    %v49 = vld [vmem:[#allocation6 + $0x18] sm:$0xff]
    %v50 = vld [vmem:[#allocation6 + $0x20] sm:$0xff]
    %v51 = vld [vmem:[#allocation6 + $0x28] sm:$0xff]
    %v52 = vld [vmem:[#allocation6 + $0x30] sm:$0xff]
    %v53 = vld [vmem:[#allocation6 + $0x38] sm:$0xff]
    %v54 = vld [vmem:[#allocation6 + $0x40] sm:$0xff]
    %v55 = vld [vmem:[#allocation6 + $0x48] sm:$0xff]
    %v56 = vld [vmem:[#allocation6 + $0x50] sm:$0xff]
    %v57 = vld [vmem:[#allocation6 + $0x58] sm:$0xff]
    %v58 = vld [vmem:[#allocation6 + $0x60] sm:$0xff]
    %v59 = vld [vmem:[#allocation6 + $0x68] sm:$0xff]
    %v60 = vld [vmem:[#allocation6 + $0x70] sm:$0xff]
    %v61 = vld [vmem:[#allocation6 + $0x78] sm:$0xff]
    %62 = vmatprep.subr.mxu0 0.0
    %63 = vmatpush1.xpose.msra.mxu0 %v46
    %64 = vmatprep.subr.mxu0 0.0
    %65 = vmatpush1.xpose.msra.mxu0 %v47
    %66 = vmatprep.subr.mxu0 0.0
    %67 = vmatpush1.xpose.msra.mxu0 %v48
    %68 = vmatprep.subr.mxu0 0.0
    %69 = vmatpush1.xpose.msra.mxu0 %v49
    %70 = vmatprep.subr.mxu0 0.0
    %71 = vmatpush1.xpose.msra.mxu0 %v50
    %72 = vmatprep.subr.mxu0 0.0
    %73 = vmatpush1.xpose.msra.mxu0 %v51
    %74 = vmatprep.subr.mxu0 0.0
    %75 = vmatpush1.xpose.msra.mxu0 %v52
    %76 = vmatprep.subr.mxu0 0.0
    %77 = vmatpush1.xpose.msra.mxu0 %v53
    %78 = vmatprep.subr.mxu0 0.0
    %79 = vmatpush1.xpose.msra.mxu0 %v54
    %80 = vmatprep.subr.mxu0 0.0
    %81 = vmatpush1.xpose.msra.mxu0 %v55
    %82 = vmatprep.subr.mxu0 0.0
    %83 = vmatpush1.xpose.msra.mxu0 %v56
    %84 = vmatprep.subr.mxu0 0.0
    %85 = vmatpush1.xpose.msra.mxu0 %v57
    %86 = vmatprep.subr.mxu0 0.0
    %87 = vmatpush1.xpose.msra.mxu0 %v58
    %88 = vmatprep.subr.mxu0 0.0
    %89 = vmatpush1.xpose.msra.mxu0 %v59
    %90 = vmatprep.subr.mxu0 0.0
    %91 = vmatpush1.xpose.msra.mxu0 %v60
    %92 = vmatprep.subr.mxu0 0.0
    %93 = vmatpush1.xpose.msra.mxu0 %v61
    %94 = vmatprep.subr.mxu0 0.0
    %95 = vmatpush1.xpose.msra.mxu0 0.0
    %96 = vmatprep.subr.mxu0 0.0
    %97 = vmatpush1.xpose.msra.mxu0 0.0
    %98 = vmatprep.subr.mxu0 0.0
    %99 = vmatpush1.xpose.msra.mxu0 0.0
    %100 = vmatprep.subr.mxu0 0.0
    %101 = vmatpush1.xpose.msra.mxu0 0.0
    %102 = vmatprep.subr.mxu0 0.0
    %103 = vmatpush1.xpose.msra.mxu0 0.0
    %104 = vmatprep.subr.mxu0 0.0
    %105 = vmatpush1.xpose.msra.mxu0 0.0
    %106 = vmatprep.subr.mxu0 0.0
    %107 = vmatpush1.xpose.msra.mxu0 0.0
    %108 = vmatprep.subr.mxu0 0.0
    %109 = vmatpush1.xpose.msra.mxu0 0.0
    %110 = vmatprep.subr.mxu0 0.0
    %111 = vmatpush1.xpose.msra.mxu0 0.0
    %112 = vmatprep.subr.mxu0 0.0
    %113 = vmatpush1.xpose.msra.mxu0 0.0
    %114 = vmatprep.subr.mxu0 0.0
    %115 = vmatpush1.xpose.msra.mxu0 0.0
    %116 = vmatprep.subr.mxu0 0.0
    %117 = vmatpush1.xpose.msra.mxu0 0.0
    %118 = vmatprep.subr.mxu0 0.0
    %119 = vmatpush1.xpose.msra.mxu0 0.0
    %120 = vmatprep.subr.mxu0 0.0
    %121 = vmatpush1.xpose.msra.mxu0 0.0
    %122 = vmatprep.subr.mxu0 0.0
    %123 = vmatpush1.xpose.msra.mxu0 0.0
    %124 = vmatprep.subr.mxu0 0.0
    %125 = vmatpush1.xpose.msra.mxu0 0.0
    %126 = vmatprep.mubr.f32.mxu0 0.0
    %127 = vmatmul.mubr.f32.gmra.mrb[0].mxu0 %v45
    %v128 = vpop.f32.mrb[0].mxu0
    %v129 = vadd.f32 0.0, %v128
    %v130 = vpop.f32.mrb[0].mxu0
    %131 = vdwg.mxu0
    %s132 = sld [smem:[#allocation2]]
    %v133 = vstv %s132
    %v134 = vmul.f32 %v129, %v133
    %v135 = vld [vmem:[%s3] sm:$0x1]
    %v137 = vlaneseq
    %v138 = vshrl.u32 %v137, 7
    %v139 = vsub.s32 0, %v138
    %v140 = vrot.slane %v135, %v139
    %v142 = vadd.f32 %v134, %v140
    %143 = vst [vmem:[#allocation8] sm:$0xff] %v142
    // Predicated region
    $region26: #{tpu_custom_call.1} parent=1 // pred_check
      _
    $region27: #{tpu_custom_call.1} parent=1 // pred_check_branch
      %145 = sbr.rel (0) target = $region29
    $region28: #{tpu_custom_call.1} parent=1 // pred_region
      %s147 = ssub.s32 128, 128
      %148 = vsyncadd [#allocation5], %s147
      %s150 = sshll.u32 [#allocation8], 4
      %s151 = int_to_ptr.vmem [resolvable:$true] %s150
      %153 = dma.vmem_to_hbm [thread:$0]  %s151, 128, %s4, [#allocation5]
    $region29: #{tpu_custom_call.1} parent=1 // pred_fallthru
      _
    // Predicated region
    $region30: #{tpu_custom_call.1} parent=1 // pred_check
      _
    $region31: #{tpu_custom_call.1} parent=1 // pred_check_branch
      %155 = sbr.rel (0) target = $region33
    $region32: #{tpu_custom_call.1} parent=1 // pred_region
      %156 = dma.done [#allocation5], 128
    $region33: #{tpu_custom_call.1} parent=1 // pred_fallthru
      _
    %157 = vsyncpa [#allocation4], 1
    %158 = vsyncpa [#allocation7], 1
    %159 = vsyncpa [#allocation5], 1

</llo_original>
